<compile_context>
chip_gen: v7x
topology: tpu7x:2x2x1
jax: 0.10.0
libtpu: 0.0.40
codegen_flags: <defaults>
</compile_context>

<pallas_src>
import functools

import jax
import jax.numpy as jnp
from jax.experimental import pallas as pl
from jax.experimental.pallas import tpu as pltpu

LANE = 128
SUBLANE = 8
_VMEM_LIMIT = 32 * 1024 * 1024   # <= ~56 MiB -> safe on v7x's 64 MiB physical VMEM


def _round_up(x: int, m: int) -> int:
    return (x + m - 1) // m * m


# ---------------------------------------------------------------------------
# Kernels
# ---------------------------------------------------------------------------
def _mlp_logits(x_ref, w1_ref, b1_ref, w2_ref, b2_ref):
    """bf16 matmuls on the MXU, f32 accumulation / bias / ReLU."""
    h = jnp.dot(x_ref[...], w1_ref[...],
                preferred_element_type=jnp.float32) + b1_ref[...]
    h = jnp.maximum(h, 0.0)
    return jnp.dot(h.astype(w2_ref.dtype), w2_ref[...],
                   preferred_element_type=jnp.float32) + b2_ref[...]


def _infer_kernel(x_ref, w1_ref, b1_ref, w2_ref, b2_ref, logits_ref):
    """Inference path: logits only, no cross-entropy work at all."""
    logits_ref[...] = _mlp_logits(x_ref, w1_ref, b1_ref, w2_ref, b2_ref)


def _train_kernel(x_ref, w1_ref, b1_ref, w2_ref, b2_ref, y_ref,
                  logits_ref, loss_ref):
    """Training path: logits + per-row cross-entropy (padded rows sliced later).

    x_ref      : (BT, S)      bf16
    w1_ref     : (S, H_pad)   bf16   (VMEM-resident, Buffered(1))
    b1_ref     : (1, H_pad)   f32
    w2_ref     : (H_pad, C_pad) bf16 (VMEM-resident, Buffered(1))
    b2_ref     : (1, C_pad)   f32    (pad class columns carry -1e30 bias)
    y_ref      : (BT, 1)      int32
    logits_ref : (BT, C_pad)  f32    (lane-dense output slab)
    loss_ref   : (BT, 1)      f32    (per-row CE; blocked per grid step)
    """
    logits = _mlp_logits(x_ref, w1_ref, b1_ref, w2_ref, b2_ref)
    logits_ref[...] = logits

    bt, cp = logits.shape
    # Padded class columns already hold ~-1e30 (baked into b2) -> exp() == 0,
    # so no explicit column mask is needed for the log-sum-exp.
    m = jnp.max(logits, axis=-1, keepdims=True)
    lse = m + jnp.log(jnp.sum(jnp.exp(logits - m), axis=-1, keepdims=True))

    class_ids = jax.lax.broadcasted_iota(jnp.int32, (bt, cp), 1)
    true_logit = jnp.sum(jnp.where(class_ids == y_ref[...], logits, 0.0),
                         axis=-1, keepdims=True)

    loss_ref[...] = lse - true_logit


# ---------------------------------------------------------------------------
# Parameters
# ---------------------------------------------------------------------------
def make_expert_params(seq_len: int, hidden: int, n_classes: int, key):
    """Deterministic unpadded f32 parameters for the assumed MLP backbone."""
    k1, k2 = jax.random.split(key)
    w1 = jax.random.normal(k1, (seq_len, hidden), jnp.float32) / jnp.sqrt(
        jnp.float32(seq_len))
    b1 = jnp.zeros((hidden,), jnp.float32)
    w2 = jax.random.normal(k2, (hidden, n_classes), jnp.float32) / jnp.sqrt(
        jnp.float32(hidden))
    b2 = jnp.zeros((n_classes,), jnp.float32)
    return {"w1": w1, "b1": b1, "w2": w2, "b2": b2,
            "seq_len": seq_len, "hidden": hidden, "n_classes": n_classes,
            "regularization_coef": 0.0}


def prepare_expert_params(raw):
    """Pad lane dims to 128, cast matmul weights to bf16, bake class mask into b2."""
    s, h, c = raw["seq_len"], raw["hidden"], raw["n_classes"]
    hp, cp = _round_up(h, LANE), _round_up(c, LANE)
    # w1 keeps its true seq_len rows; only the hidden lane dim is padded.
    w1p = jnp.zeros((s, hp), jnp.bfloat16).at[:, :h].set(
        raw["w1"].astype(jnp.bfloat16))
    b1p = jnp.zeros((1, hp), jnp.float32).at[0, :h].set(raw["b1"])
    w2p = jnp.zeros((hp, cp), jnp.bfloat16).at[:h, :c].set(
        raw["w2"].astype(jnp.bfloat16))
    # Pad class columns get a -1e30 bias -> they vanish from the log-sum-exp.
    b2p = jnp.full((1, cp), -1e30, jnp.float32).at[0, :c].set(raw["b2"])
    return {"w1": w1p, "b1": b1p, "w2": w2p, "b2": b2p,
            "seq_len": s, "hidden": h, "n_classes": c,
            "regularization_coef": raw.get("regularization_coef", 0.0)}


# ---------------------------------------------------------------------------
# pallas_call wrappers
# ---------------------------------------------------------------------------
def _batch_tiling(batch: int):
    bp0 = _round_up(batch, SUBLANE)
    block_b = min(bp0, 512)          # fatter tiles; 128-multiple once batch >= 512
    bp = _round_up(bp0, block_b)
    return bp, block_b, bp // block_b


def _pad_x_bf16(x, bp):
    batch, seq_len = x.shape
    if bp == batch:
        return x.astype(jnp.bfloat16)
    return jnp.zeros((bp, seq_len), jnp.bfloat16).at[:batch].set(
        x.astype(jnp.bfloat16))


def _weight_specs(seq_len, hp, cp):
    # Constant index_map blocks: single-buffered, stay VMEM-resident.
    return [
        pl.BlockSpec((seq_len, hp), lambda i: (0, 0), pipeline_mode=pl.Buffered(1)),
        pl.BlockSpec((1, hp), lambda i: (0, 0), pipeline_mode=pl.Buffered(1)),
        pl.BlockSpec((hp, cp), lambda i: (0, 0), pipeline_mode=pl.Buffered(1)),
        pl.BlockSpec((1, cp), lambda i: (0, 0), pipeline_mode=pl.Buffered(1)),
    ]


@functools.partial(jax.jit, static_argnames=("n_classes",))
def _expert_call_infer(x, w1p, b1p, w2p, b2p, *, n_classes):
    batch, seq_len = x.shape
    hp = w1p.shape[1]
    cp = w2p.shape[1]
    bp, block_b, num_tiles = _batch_tiling(batch)
    xp = _pad_x_bf16(x, bp)

    logits_p = pl.pallas_call(
        _infer_kernel,
        out_shape=jax.ShapeDtypeStruct((bp, cp), jnp.float32),
        grid=(num_tiles,),
        in_specs=[pl.BlockSpec((block_b, seq_len), lambda i: (i, 0))]
        + _weight_specs(seq_len, hp, cp),
        out_specs=pl.BlockSpec((block_b, cp), lambda i: (i, 0)),
        compiler_params=pltpu.CompilerParams(
            dimension_semantics=("parallel",),
            vmem_limit_bytes=_VMEM_LIMIT),
    )(xp, w1p, b1p, w2p, b2p)
    return logits_p[:batch, :n_classes]


@functools.partial(jax.jit, static_argnames=("n_classes",))
def _expert_call_train(x, w1p, b1p, w2p, b2p, y, *, n_classes):
    batch, seq_len = x.shape
    hp = w1p.shape[1]
    cp = w2p.shape[1]
    bp, block_b, num_tiles = _batch_tiling(batch)

    xp = _pad_x_bf16(x, bp)
    if bp == batch:
        yp = y.astype(jnp.int32).reshape(bp, 1)
    else:
        yp = jnp.zeros((bp, 1), jnp.int32).at[:batch, 0].set(y.astype(jnp.int32))

    logits_p, loss_rows = pl.pallas_call(
        _train_kernel,
        out_shape=(jax.ShapeDtypeStruct((bp, cp), jnp.float32),
                   jax.ShapeDtypeStruct((bp, 1), jnp.float32)),
        grid=(num_tiles,),
        in_specs=[pl.BlockSpec((block_b, seq_len), lambda i: (i, 0))]
        + _weight_specs(seq_len, hp, cp)
        + [pl.BlockSpec((block_b, 1), lambda i: (i, 0))],        # y (lane-thin)
        out_specs=(
            pl.BlockSpec((block_b, cp), lambda i: (i, 0)),       # logits (lane-dense)
            pl.BlockSpec((block_b, 1), lambda i: (i, 0)),        # per-row CE
        ),
        compiler_params=pltpu.CompilerParams(
            dimension_semantics=("parallel",),                   # v7x megacore safe:
            vmem_limit_bytes=_VMEM_LIMIT),                       # all outputs blocked per step
    )(xp, w1p, b1p, w2p, b2p, yp)

    loss = jnp.sum(loss_rows[:batch, 0]) / jnp.float32(batch)    # mean reduction
    return logits_p[:batch, :n_classes], loss


# ---------------------------------------------------------------------------
# Module-level forward (mirrors ExpertModel.forward)
# ---------------------------------------------------------------------------
def expert_model_forward(params, x, y=None):
    """Returns (logits, loss); loss is None when y is None."""
    n_classes = params["n_classes"]
    if y is None:
        logits = _expert_call_infer(x, params["w1"], params["b1"],
                                    params["w2"], params["b2"],
                                    n_classes=n_classes)
        return logits, None

    logits, task_loss = _expert_call_train(
        x, params["w1"], params["b1"], params["w2"], params["b2"], y,
        n_classes=n_classes)
    # TODO(synk): EWC penalty — self.ewc is None at __init__, so the reg term
    # is identically 0; only the task cross-entropy contributes to the loss.
    loss = task_loss + params.get("regularization_coef", 0.0) * 0.0
    return logits, loss


# ---------------------------------------------------------------------------
# Demo / self-check
# ---------------------------------------------------------------------------
if __name__ == "__main__":
    batch, seq_len, hidden, head_size = 8, 16, 32, 10

    key = jax.random.PRNGKey(0)
    kx, ky, kp = jax.random.split(key, 3)
    x = jax.random.normal(kx, (batch, seq_len), jnp.float32)
    y = jax.random.randint(ky, (batch,), 0, head_size, jnp.int32)

    raw = make_expert_params(seq_len, hidden, head_size, kp)
    params = prepare_expert_params(raw)

    # forward with labels -> (logits, loss)
    logits, loss = expert_model_forward(params, x, y)
    jax.block_until_ready((logits, loss))

    # forward without labels -> (logits, None), like get_preds / forward(x)
    logits_inf, no_loss = expert_model_forward(params, x, None)
    jax.block_until_ready(logits_inf)
    assert no_loss is None

    # Pure-JAX reference using the same bf16-matmul / f32-accumulate precision.
    w1, b1, w2, b2 = raw["w1"], raw["b1"], raw["w2"], raw["b2"]
    h_ref = jnp.maximum(
        jnp.dot(x.astype(jnp.bfloat16), w1.astype(jnp.bfloat16),
                preferred_element_type=jnp.float32) + b1[None, :], 0.0)
    logits_ref = jnp.dot(h_ref.astype(jnp.bfloat16), w2.astype(jnp.bfloat16),
                         preferred_element_type=jnp.float32) + b2[None, :]
    lse_ref = jax.nn.logsumexp(logits_ref, axis=-1)
    loss_ref = jnp.mean(lse_ref - logits_ref[jnp.arange(batch), y])

    assert jnp.allclose(logits, logits_ref, atol=2e-3, rtol=2e-3), \
        float(jnp.max(jnp.abs(logits - logits_ref)))
    assert jnp.allclose(logits_inf, logits_ref, atol=2e-3, rtol=2e-3)
    assert jnp.allclose(loss, loss_ref, atol=2e-3, rtol=2e-3), \
        (float(loss), float(loss_ref))

    print("KERNEL_OK")
</pallas_src>

<mosaic_0001>
module attributes {stable_mosaic.version = 11 : i64} {
  func.func @_train_kernel(%arg0: i32, %arg1: memref<8x16xbf16, #tpu.memory_space<vmem>>, %arg2: memref<16x128xbf16, #tpu.memory_space<vmem>>, %arg3: memref<1x128xf32, #tpu.memory_space<vmem>>, %arg4: memref<128x128xbf16, #tpu.memory_space<vmem>>, %arg5: memref<1x128xf32, #tpu.memory_space<vmem>>, %arg6: memref<8x1xi32, #tpu.memory_space<vmem>>, %arg7: memref<8x128xf32, #tpu.memory_space<vmem>>, %arg8: memref<8x1xf32, #tpu.memory_space<vmem>>) attributes {dimension_semantics = [#tpu.dimension_semantics<parallel>], iteration_bounds = array<i64: 1>, scalar_prefetch = 0 : i64, scratch_operands = 0 : i64, tpu.core_type = #tpu.core_type<tc>, window_params = [{transform_indices = @transform_0, window_bounds = array<i64: 8, 16>}, {pipeline_mode = #tpu.pipeline_mode<synchronous>, transform_indices = @transform_1, window_bounds = array<i64: 16, 128>}, {pipeline_mode = #tpu.pipeline_mode<synchronous>, transform_indices = @transform_2, window_bounds = array<i64: 1, 128>}, {pipeline_mode = #tpu.pipeline_mode<synchronous>, transform_indices = @transform_3, window_bounds = array<i64: 128, 128>}, {pipeline_mode = #tpu.pipeline_mode<synchronous>, transform_indices = @transform_4, window_bounds = array<i64: 1, 128>}, {transform_indices = @transform_5, window_bounds = array<i64: 8, 1>}, {transform_indices = @transform_6, window_bounds = array<i64: 8, 128>}, {transform_indices = @transform_7, window_bounds = array<i64: 8, 1>}]} {
    %c0 = arith.constant 0 : index
    %c0_0 = arith.constant 0 : index
    %0 = vector.load %arg1[%c0, %c0_0] : memref<8x16xbf16, #tpu.memory_space<vmem>>, vector<8x16xbf16>
    %c0_1 = arith.constant 0 : index
    %c0_2 = arith.constant 0 : index
    %1 = vector.load %arg2[%c0_1, %c0_2] : memref<16x128xbf16, #tpu.memory_space<vmem>>, vector<16x128xbf16>
    %cst = arith.constant dense<0.000000e+00> : vector<8x128xf32>
    %2 = tpu.matmul %0, %1, %cst {dimension_numbers = #tpu.dot_dimension_numbers<[1], [0], [0], [1], [0, 0, 1, 1], [], []>} : vector<8x16xbf16>, vector<16x128xbf16>, vector<8x128xf32> -> vector<8x128xf32>
    %c0_3 = arith.constant 0 : index
    %c0_4 = arith.constant 0 : index
    %3 = vector.load %arg3[%c0_3, %c0_4] : memref<1x128xf32, #tpu.memory_space<vmem>>, vector<1x128xf32>
    %4 = vector.broadcast %3 : vector<1x128xf32> to vector<8x128xf32>
    %5 = arith.addf %2, %4 : vector<8x128xf32>
    %cst_5 = arith.constant 0.000000e+00 : f32
    %6 = vector.broadcast %cst_5 : f32 to vector<8x128xf32>
    %7 = arith.maximumf %5, %6 : vector<8x128xf32>
    %8 = arith.truncf %7 : vector<8x128xf32> to vector<8x128xbf16>
    %c0_6 = arith.constant 0 : index
    %c0_7 = arith.constant 0 : index
    %9 = vector.load %arg4[%c0_6, %c0_7] : memref<128x128xbf16, #tpu.memory_space<vmem>>, vector<128x128xbf16>
    %cst_8 = arith.constant dense<0.000000e+00> : vector<8x128xf32>
    %10 = tpu.matmul %8, %9, %cst_8 {dimension_numbers = #tpu.dot_dimension_numbers<[1], [0], [0], [1], [0, 0, 1, 1], [], []>} : vector<8x128xbf16>, vector<128x128xbf16>, vector<8x128xf32> -> vector<8x128xf32>
    %c0_9 = arith.constant 0 : index
    %c0_10 = arith.constant 0 : index
    %11 = vector.load %arg5[%c0_9, %c0_10] : memref<1x128xf32, #tpu.memory_space<vmem>>, vector<1x128xf32>
    %12 = vector.broadcast %11 : vector<1x128xf32> to vector<8x128xf32>
    %13 = arith.addf %10, %12 : vector<8x128xf32>
    %c0_11 = arith.constant 0 : index
    %c0_12 = arith.constant 0 : index
    %14 = vector.load %arg7[%c0_11, %c0_12] : memref<8x128xf32, #tpu.memory_space<vmem>>, vector<8x128xf32>
    tpu.vector_store %arg7[%c0_11, %c0_12], %13 {strides = array<i32>} : memref<8x128xf32, #tpu.memory_space<vmem>>, vector<8x128xf32>,
    %cst_13 = arith.constant dense<0xFF800000> : vector<8xf32>
    %15 = vector.multi_reduction <maximumf>, %13, %cst_13 [1] : vector<8x128xf32> to vector<8xf32>
    %16 = vector.shape_cast %15 : vector<8xf32> to vector<8x1xf32>
    %17 = vector.broadcast %16 : vector<8x1xf32> to vector<8x128xf32>
    %18 = arith.subf %13, %17 : vector<8x128xf32>
    %19 = math.exp %18 : vector<8x128xf32>
    %cst_14 = arith.constant dense<0.000000e+00> : vector<8xf32>
    %20 = vector.multi_reduction <add>, %19, %cst_14 [1] : vector<8x128xf32> to vector<8xf32>
    %21 = vector.shape_cast %20 : vector<8xf32> to vector<8x1xf32>
    %22 = math.log %21 : vector<8x1xf32>
    %23 = arith.addf %16, %22 : vector<8x1xf32>
    %24 = tpu.iota {dimensions = array<i32: 1>} : vector<8x128xi32>
    %c0_15 = arith.constant 0 : index
    %c0_16 = arith.constant 0 : index
    %25 = vector.load %arg6[%c0_15, %c0_16] : memref<8x1xi32, #tpu.memory_space<vmem>>, vector<8x1xi32>
    %26 = vector.broadcast %25 : vector<8x1xi32> to vector<8x128xi32>
    %27 = arith.cmpi eq, %24, %26 : vector<8x128xi32>
    %cst_17 = arith.constant 0.000000e+00 : f32
    %28 = vector.broadcast %cst_17 : f32 to vector<8x128xf32>
    %29 = arith.select %27, %13, %28 : vector<8x128xi1>, vector<8x128xf32>
    %cst_18 = arith.constant dense<0.000000e+00> : vector<8xf32>
    %30 = vector.multi_reduction <add>, %29, %cst_18 [1] : vector<8x128xf32> to vector<8xf32>
    %31 = vector.shape_cast %30 : vector<8xf32> to vector<8x1xf32>
    %32 = arith.subf %23, %31 : vector<8x1xf32>
    %c0_19 = arith.constant 0 : index
    %c0_20 = arith.constant 0 : index
    %33 = vector.load %arg8[%c0_19, %c0_20] : memref<8x1xf32, #tpu.memory_space<vmem>>, vector<8x1xf32>
    tpu.vector_store %arg8[%c0_19, %c0_20], %32 {strides = array<i32>} : memref<8x1xf32, #tpu.memory_space<vmem>>, vector<8x1xf32>,
    return
  }
  func.func @transform_0(%arg0: i32) -> (i32, i32) {
    %c0_i32 = arith.constant 0 : i32
    %c0_i32_0 = arith.constant 0 : i32
    return %arg0, %c0_i32 : i32, i32
  }
  func.func @transform_1(%arg0: i32) -> (i32, i32) {
    %c0_i32 = arith.constant 0 : i32
    %c0_i32_0 = arith.constant 0 : i32
    %c0_i32_1 = arith.constant 0 : i32
    return %c0_i32, %c0_i32_0 : i32, i32
  }
  func.func @transform_2(%arg0: i32) -> (i32, i32) {
    %c0_i32 = arith.constant 0 : i32
    %c0_i32_0 = arith.constant 0 : i32
    %c0_i32_1 = arith.constant 0 : i32
    return %c0_i32, %c0_i32_0 : i32, i32
  }
  func.func @transform_3(%arg0: i32) -> (i32, i32) {
    %c0_i32 = arith.constant 0 : i32
    %c0_i32_0 = arith.constant 0 : i32
    %c0_i32_1 = arith.constant 0 : i32
    return %c0_i32, %c0_i32_0 : i32, i32
  }
  func.func @transform_4(%arg0: i32) -> (i32, i32) {
    %c0_i32 = arith.constant 0 : i32
    %c0_i32_0 = arith.constant 0 : i32
    %c0_i32_1 = arith.constant 0 : i32
    return %c0_i32, %c0_i32_0 : i32, i32
  }
  func.func @transform_5(%arg0: i32) -> (i32, i32) {
    %c0_i32 = arith.constant 0 : i32
    %c0_i32_0 = arith.constant 0 : i32
    return %arg0, %c0_i32 : i32, i32
  }
  func.func @transform_6(%arg0: i32) -> (i32, i32) {
    %c0_i32 = arith.constant 0 : i32
    %c0_i32_0 = arith.constant 0 : i32
    return %arg0, %c0_i32 : i32, i32
  }
  func.func @transform_7(%arg0: i32) -> (i32, i32) {
    %c0_i32 = arith.constant 0 : i32
    %c0_i32_0 = arith.constant 0 : i32
    return %arg0, %c0_i32 : i32, i32
  }
}

</mosaic_0001>

<llo_original>
// kernel: _expert_call_train.1
$region0: #{_expert_call_train.1}
  #allocation0 [shape = 'u32[]', space=smem, size = 0x4, offset = 0x4, fixed_abs, tag = 'smem constant byte address 0x4 - core index']
  #allocation1 [shape = 'u32[144,128]{1,0:T(1,128)}', space=vmem, size = 0x12000, scoped, tag = 'internal scratch']
  %s0 = inlined_call_operand.vmem [shape: bf16[8,16], index: 0, kind: input, shape index: {}]
  %s1 = inlined_call_operand.vmem [shape: bf16[16,128], index: 1, kind: input, shape index: {}]
  %s2 = inlined_call_operand.vmem [shape: f32[1,128], index: 2, kind: input, shape index: {}]
  %s3 = inlined_call_operand.hbm [shape: bf16[128,128], index: 3, kind: input, shape index: {}]
  %s4 = inlined_call_operand.vmem [shape: f32[1,128], index: 4, kind: input, shape index: {}]
  %s5 = inlined_call_operand.vmem [shape: s32[8,1], index: 5, kind: input, shape index: {}]
  %s6 = inlined_call_operand.hbm [shape: f32[8,128], index: 6, kind: output, shape index: {0}]
  %s7 = inlined_call_operand.vmem [shape: f32[8,1], index: 7, kind: output, shape index: {1}]
  %8 = xla_tuple %s6, %s7
  %s9 = sld [smem:[#allocation0]]
  $region46: #{_expert_call_train.1} parent=0
    _
  %s11 = ssub.s32 1, %s9
  %s12 = scalar_select 0, %s11, %s9
  $region1: #{_expert_call_train.1} parent=0
    #allocation2 [shape = 'u8[32768]{0}', space=vmem, size = 0x8000, scoped, tag = 'input window, operand 3, single buffered']
    #allocation3 [shape = 's32[1]{0}', space=sflag, size = 0x4, scoped, tag = 'scoped memory for _expert_call_train.1']
    #allocation4 [shape = 's32[1]{0}', space=sflag, size = 0x4, scoped, tag = 'scoped memory for _expert_call_train.1']
    #allocation5 [shape = 'u8[4096]{0}', space=vmem, size = 0x1000, scoped, tag = 'output window, operand 0, single buffered']
    %13 = vsyncpa [#allocation3], 0
    %14 = vsyncpa [#allocation4], 0
    // Predicated region
    $region2: #{_expert_call_train.1} parent=1 // pred_check
      _
    $region3: #{_expert_call_train.1} parent=1 // pred_check_branch
      %16 = sbr.rel (0) target = $region5
    $region4: #{_expert_call_train.1} parent=1 // pred_region
      _
    $region5: #{_expert_call_train.1} parent=1 // pred_fallthru
      _
    // Predicated region
    $region6: #{_expert_call_train.1} parent=1 // pred_check
      _
    $region7: #{_expert_call_train.1} parent=1 // pred_check_branch
      %18 = sbr.rel (0) target = $region9
    $region8: #{_expert_call_train.1} parent=1 // pred_region
      _
    $region9: #{_expert_call_train.1} parent=1 // pred_fallthru
      _
    // Predicated region
    $region10: #{_expert_call_train.1} parent=1 // pred_check
      _
    $region11: #{_expert_call_train.1} parent=1 // pred_check_branch
      %20 = sbr.rel (0) target = $region13
    $region12: #{_expert_call_train.1} parent=1 // pred_region
      _
    $region13: #{_expert_call_train.1} parent=1 // pred_fallthru
      _
    // Predicated region
    $region14: #{_expert_call_train.1} parent=1 // pred_check
      _
    $region15: #{_expert_call_train.1} parent=1 // pred_check_branch
      %22 = sbr.rel (0) target = $region17
    $region16: #{_expert_call_train.1} parent=1 // pred_region
      %s24 = ssub.s32 1024, 1024
      %25 = vsyncadd [#allocation3], %s24
      %s26 = sshll.u32 [#allocation2], 4
      %s27 = int_to_ptr.vmem [resolvable:$true] %s26
      %32 = dma.hbm_to_vmem [thread:$0]  %s3, 1024, %s27, [#allocation3], 64, 64, 4
    $region17: #{_expert_call_train.1} parent=1 // pred_fallthru
      _
    // Predicated region
    $region18: #{_expert_call_train.1} parent=1 // pred_check
      _
    $region19: #{_expert_call_train.1} parent=1 // pred_check_branch
      %34 = sbr.rel (0) target = $region21
    $region20: #{_expert_call_train.1} parent=1 // pred_region
      _
    $region21: #{_expert_call_train.1} parent=1 // pred_fallthru
      _
    // Predicated region
    $region22: #{_expert_call_train.1} parent=1 // pred_check
      _
    $region23: #{_expert_call_train.1} parent=1 // pred_check_branch
      %36 = sbr.rel (0) target = $region25
    $region24: #{_expert_call_train.1} parent=1 // pred_region
      _
    $region25: #{_expert_call_train.1} parent=1 // pred_fallthru
      _
    // Predicated region
    $region26: #{_expert_call_train.1} parent=1 // pred_check
      _
    $region27: #{_expert_call_train.1} parent=1 // pred_check_branch
      %38 = sbr.rel (0) target = $region29
    $region28: #{_expert_call_train.1} parent=1 // pred_region
      %39 = dma.done [#allocation3], 1024
    $region29: #{_expert_call_train.1} parent=1 // pred_fallthru
      _
    %v41 = vld [vmem:[%s0] sm:$0xf]
    %v42 = vld [vmem:[%s1] sm:$0xf]
    %v43 = vld [vmem:[%s1 + $0x4] sm:$0xf]
    %v44 = vld [vmem:[%s2] sm:$0x1]
    %v46 = vlaneseq
    %v47 = vshrl.u32 %v46, 7
    %v48 = vsub.s32 0, %v47
    %v49 = vrot.slane %v44, %v48
    %v53 = vunpack.c.l.b16 %v42
    %v54 = vunpack.c.l.b16 %v43
    %v55 = vpack.c.b16 %v54, %v53
    %vm57 = vcmask 130048
    %v59 = vsel %vm57, %v41, 0
    %61 = vmatprep.subr.bf16.mxu0 0
    %62 = vmatpush1.bf16.msra.mxu0 %v55
    %63 = vmatprep.subr.bf16.mxu0 0
    %64 = vmatpush1.bf16.msra.mxu0 0
    %65 = vmatprep.subr.bf16.mxu0 0
    %66 = vmatpush1.bf16.msra.mxu0 0
    %67 = vmatprep.subr.bf16.mxu0 0
    %68 = vmatpush1.bf16.msra.mxu0 0
    %69 = vmatprep.subr.bf16.mxu0 0
    %70 = vmatpush1.bf16.msra.mxu0 0
    %71 = vmatprep.subr.bf16.mxu0 0
    %72 = vmatpush1.bf16.msra.mxu0 0
    %73 = vmatprep.subr.bf16.mxu0 0
    %74 = vmatpush1.bf16.msra.mxu0 0
    %75 = vmatprep.subr.bf16.mxu0 0
    %76 = vmatpush1.bf16.msra.mxu0 0
    %77 = vmatprep.subr.bf16.mxu0 0
    %78 = vmatpush1.bf16.msra.mxu0 0
    %79 = vmatprep.subr.bf16.mxu0 0
    %80 = vmatpush1.bf16.msra.mxu0 0
    %81 = vmatprep.subr.bf16.mxu0 0
    %82 = vmatpush1.bf16.msra.mxu0 0
    %83 = vmatprep.subr.bf16.mxu0 0
    %84 = vmatpush1.bf16.msra.mxu0 0
    %85 = vmatprep.subr.bf16.mxu0 0
    %86 = vmatpush1.bf16.msra.mxu0 0
    %87 = vmatprep.subr.bf16.mxu0 0
    %88 = vmatpush1.bf16.msra.mxu0 0
    %89 = vmatprep.subr.bf16.mxu0 0
    %90 = vmatpush1.bf16.msra.mxu0 0
    %91 = vmatprep.subr.bf16.mxu0 0
    %92 = vmatpush1.bf16.msra.mxu0 0
    %93 = vmatprep.mubr.bf16.mxu0 0
    %94 = vmatmul.mubr.bf16.gmra.mrb[0].mxu0 %v59
    %v95 = vpop.f32.mrb[0].mxu0
    %v96 = vadd.f32 %v49, %v95
    %v97 = vpop.f32.mrb[0].mxu0
    %v98 = vpop.f32.mrb[0].mxu0
    %v99 = vpop.f32.mrb[0].mxu0
    %100 = vdwg.mxu0
    %v101 = vmax.f32 %v96, 0.0
    %v102 = vpack.c.bf16 %v101, %v101
    %v103 = vld [vmem:[#allocation2] sm:$0xf]
    %v104 = vld [vmem:[#allocation2 + $0x4] sm:$0xf]
    %v105 = vld [vmem:[#allocation2 + $0x8] sm:$0xf]
    %v106 = vld [vmem:[#allocation2 + $0xc] sm:$0xf]
    %v107 = vld [vmem:[#allocation2 + $0x10] sm:$0xf]
    %v108 = vld [vmem:[#allocation2 + $0x14] sm:$0xf]
    %v109 = vld [vmem:[#allocation2 + $0x18] sm:$0xf]
    %v110 = vld [vmem:[#allocation2 + $0x1c] sm:$0xf]
    %v111 = vld [vmem:[#allocation2 + $0x20] sm:$0xf]
    %v112 = vld [vmem:[#allocation2 + $0x24] sm:$0xf]
    %v113 = vld [vmem:[#allocation2 + $0x28] sm:$0xf]
    %v114 = vld [vmem:[#allocation2 + $0x2c] sm:$0xf]
    %v115 = vld [vmem:[#allocation2 + $0x30] sm:$0xf]
    %v116 = vld [vmem:[#allocation2 + $0x34] sm:$0xf]
    %v117 = vld [vmem:[#allocation2 + $0x38] sm:$0xf]
    %v118 = vld [vmem:[#allocation2 + $0x3c] sm:$0xf]
    %v119 = vld [vmem:[%s4] sm:$0x1]
    %v121 = vlaneseq
    %v122 = vshrl.u32 %v121, 7
    %v123 = vsub.s32 0, %v122
    %v124 = vrot.slane %v119, %v123
    %v142 = vunpack.c.l.b16 %v103
    %v143 = vunpack.c.l.b16 %v104
    %v144 = vunpack.c.l.b16 %v105
    %v145 = vunpack.c.l.b16 %v106
    %v146 = vunpack.c.l.b16 %v107
    %v147 = vunpack.c.l.b16 %v108
    %v148 = vunpack.c.l.b16 %v109
    %v149 = vunpack.c.l.b16 %v110
    %v150 = vunpack.c.l.b16 %v111
    %v151 = vunpack.c.l.b16 %v112
    %v152 = vunpack.c.l.b16 %v113
    %v153 = vunpack.c.l.b16 %v114
    %v154 = vunpack.c.l.b16 %v115
    %v155 = vunpack.c.l.b16 %v116
    %v156 = vunpack.c.l.b16 %v117
    %v157 = vunpack.c.l.b16 %v118
    %v158 = vpack.c.b16 %v143, %v142
    %v159 = vpack.c.b16 %v145, %v144
    %v160 = vpack.c.b16 %v147, %v146
    %v161 = vpack.c.b16 %v149, %v148
    %v162 = vpack.c.b16 %v151, %v150
    %v163 = vpack.c.b16 %v153, %v152
    %v164 = vpack.c.b16 %v155, %v154
    %v165 = vpack.c.b16 %v157, %v156
    %174 = vmatprep.subr.bf16.mxu0 0
    %175 = vmatpush1.bf16.msra.mxu0 %v158
    %176 = vmatprep.subr.bf16.mxu0 0
    %177 = vmatpush1.bf16.msra.mxu0 %v159
    %178 = vmatprep.subr.bf16.mxu0 0
    %179 = vmatpush1.bf16.msra.mxu0 %v160
    %180 = vmatprep.subr.bf16.mxu0 0
    %181 = vmatpush1.bf16.msra.mxu0 %v161
    %182 = vmatprep.subr.bf16.mxu0 0
    %183 = vmatpush1.bf16.msra.mxu0 %v162
    %184 = vmatprep.subr.bf16.mxu0 0
    %185 = vmatpush1.bf16.msra.mxu0 %v163
    %186 = vmatprep.subr.bf16.mxu0 0
    %187 = vmatpush1.bf16.msra.mxu0 %v164
    %188 = vmatprep.subr.bf16.mxu0 0
    %189 = vmatpush1.bf16.msra.mxu0 %v165
    %190 = vmatprep.subr.bf16.mxu0 0
    %191 = vmatpush1.bf16.msra.mxu0 0
    %192 = vmatprep.subr.bf16.mxu0 0
    %193 = vmatpush1.bf16.msra.mxu0 0
    %194 = vmatprep.subr.bf16.mxu0 0
    %195 = vmatpush1.bf16.msra.mxu0 0
    %196 = vmatprep.subr.bf16.mxu0 0
    %197 = vmatpush1.bf16.msra.mxu0 0
    %198 = vmatprep.subr.bf16.mxu0 0
    %199 = vmatpush1.bf16.msra.mxu0 0
    %200 = vmatprep.subr.bf16.mxu0 0
    %201 = vmatpush1.bf16.msra.mxu0 0
    %202 = vmatprep.subr.bf16.mxu0 0
    %203 = vmatpush1.bf16.msra.mxu0 0
    %204 = vmatprep.subr.bf16.mxu0 0
    %205 = vmatpush1.bf16.msra.mxu0 0
    %206 = vmatprep.mubr.bf16.mxu0 0
    %207 = vmatmul.mubr.bf16.gmra.mrb[0].mxu0 %v102
    %v208 = vpop.f32.mrb[0].mxu0
    %v209 = vadd.f32 %v124, %v208
    %v210 = vpop.f32.mrb[0].mxu0
    %v211 = vpop.f32.mrb[0].mxu0
    %v212 = vpop.f32.mrb[0].mxu0
    %213 = vdwg.mxu0
    %214 = vst [vmem:[#allocation5] sm:$0xff] %v209
    %215 = vmax.xlane.f32.xlu0 %v209
    %v216 = vpop.xlane.xlu0 %215
    %v217 = vsub.f32 %v209, %v216
    %v218 = vmul.f32 %v217, 1.442695
    %v219 = vpow.pop %v218
    %220 = vadd.xlane.f32.xlu0 %v219
    %v221 = vpop.xlane.xlu0 %220
    %v222 = vlog2.pop %v221
    %v223 = vmul.f32 %v222, 0.6931472
    %v224 = vadd.f32 %v216, %v223
    %v225 = vlaneseq
    %v226 = vand.u32 %v225, 127
    %v227 = vld [vmem:[%s5] sm:$0xff]
    %228 = vset.pattern.permute.xlu0 0
    %229 = vperm.xlu0 %228, %v227
    %v230 = vpop.permute.xlu0 %229
    %vm231 = vcmp.eq.s32.totalorder %v226, %v230
    %v232 = vsel %vm231, %v209, 0.0
    %233 = vadd.xlane.f32.xlu0 %v232
    %v234 = vpop.xlane.xlu0 %233
    %v235 = vsub.f32 %v224, %v234
    %vm236 = vcmask 7168
    %237 = vst.msk [vmem:[%s7] sm:$0xff] %vm236, %v235
    // Predicated region
    $region30: #{_expert_call_train.1} parent=1 // pred_check
      _
    $region31: #{_expert_call_train.1} parent=1 // pred_check_branch
      %239 = sbr.rel (0) target = $region33
    $region32: #{_expert_call_train.1} parent=1 // pred_region
      %s241 = ssub.s32 128, 128
      %242 = vsyncadd [#allocation4], %s241
      %s244 = sshll.u32 [#allocation5], 4
      %s245 = int_to_ptr.vmem [resolvable:$true] %s244
      %247 = dma.vmem_to_hbm [thread:$0]  %s245, 128, %s6, [#allocation4]
    $region33: #{_expert_call_train.1} parent=1 // pred_fallthru
      _
    // Predicated region
    $region34: #{_expert_call_train.1} parent=1 // pred_check
      _
    $region35: #{_expert_call_train.1} parent=1 // pred_check_branch
      %249 = sbr.rel (0) target = $region37
    $region36: #{_expert_call_train.1} parent=1 // pred_region
      _
    $region37: #{_expert_call_train.1} parent=1 // pred_fallthru
      _
    // Predicated region
    $region38: #{_expert_call_train.1} parent=1 // pred_check
      _
    $region39: #{_expert_call_train.1} parent=1 // pred_check_branch
      %251 = sbr.rel (0) target = $region41
    $region40: #{_expert_call_train.1} parent=1 // pred_region
      %252 = dma.done [#allocation4], 128
    $region41: #{_expert_call_train.1} parent=1 // pred_fallthru
      _
    // Predicated region
    $region42: #{_expert_call_train.1} parent=1 // pred_check
      _
    $region43: #{_expert_call_train.1} parent=1 // pred_check_branch
      %254 = sbr.rel (0) target = $region45
    $region44: #{_expert_call_train.1} parent=1 // pred_region
      _
    $region45: #{_expert_call_train.1} parent=1 // pred_fallthru
      _
    %255 = vsyncpa [#allocation3], 1
    %256 = vsyncpa [#allocation4], 1

</llo_original>
